<compile_context>
chip_gen: v6e
topology: v6e:2x2x1
jax: 0.10.0
libtpu: 0.0.40
codegen_flags: <defaults>
</compile_context>

<pallas_src>
import functools

import jax
import jax.numpy as jnp
from jax.experimental import pallas as pl
from jax.experimental.pallas import tpu as pltpu

LANE = 128
SUBLANE = 8


def mlp_kernel(x_ref, w1_ref, b1_ref, w2_ref, b2_ref,
               w3_ref, b3_ref, w4_ref, b4_ref, o_ref):
    """Fused 4-layer MLP on one batch tile. MXU inputs in the weights' dtype (bf16),
    accumulation + bias + nonlinearity in f32."""
    cdt = w1_ref.dtype  # compute dtype for MXU operands (bf16 by default)

    h = jnp.dot(x_ref[...], w1_ref[...], preferred_element_type=jnp.float32) + b1_ref[...]
    h = jnp.maximum(h, 0.0).astype(cdt)

    h = jnp.dot(h, w2_ref[...], preferred_element_type=jnp.float32) + b2_ref[...]
    h = jnp.maximum(h, 0.0).astype(cdt)

    h = jnp.dot(h, w3_ref[...], preferred_element_type=jnp.float32) + b3_ref[...]
    h = jnp.maximum(h, 0.0).astype(cdt)

    logits = jnp.dot(h, w4_ref[...], preferred_element_type=jnp.float32) + b4_ref[...]
    o_ref[...] = jax.nn.sigmoid(logits).astype(o_ref.dtype)


def mlp_forward(x, params, *, batch_tile=128, compute_dtype=jnp.bfloat16):
    """Pallas forward pass. Pads batch to a sublane-friendly tile and the output
    feature dim to a lane-dense multiple of 128; slices both back before returning."""
    w1, b1, w2, b2, w3, b3, w4, b4 = params
    B, in_size = x.shape
    out_size = w4.shape[1]

    # ---- lane-dense output: pad fc4 out-dim up to a multiple of 128 ----------------
    out_pad = pl.cdiv(out_size, LANE) * LANE
    w4p = jnp.pad(w4, ((0, 0), (0, out_pad - out_size)))
    b4p = jnp.pad(b4, ((0, 0), (0, out_pad - out_size)))

    # ---- batch tiling: sublane-multiple tile, pad batch to a tile multiple ---------
    tb = min(batch_tile, pl.cdiv(B, SUBLANE) * SUBLANE)
    Bp = pl.cdiv(B, tb) * tb
    xp = jnp.pad(x, ((0, Bp - B), (0, 0)))
    grid = (Bp // tb,)

    # ---- bf16 MXU operands (halves resident weight bytes; f32 accumulation) --------
    xp = xp.astype(compute_dtype)
    w1c = w1.astype(compute_dtype)
    w2c = w2.astype(compute_dtype)
    w3c = w3.astype(compute_dtype)
    w4c = w4p.astype(compute_dtype)

    x_spec = pl.BlockSpec((tb, in_size), lambda i: (i, 0))
    out_spec = pl.BlockSpec((tb, out_pad), lambda i: (i, 0))

    def resident(arr):
        # Full-array block, same block every grid step -> stays resident in VMEM.
        return pl.BlockSpec(arr.shape, lambda i: (0, 0))

    operands = (xp, w1c, b1, w2c, b2, w3c, b3, w4c, b4p)
    in_specs = [x_spec] + [resident(a) for a in operands[1:]]

    # ---- advisory cost estimate -----------------------------------------------------
    flops = 2 * Bp * (in_size * w1.shape[1]
                      + w2.shape[0] * w2.shape[1]
                      + w3.shape[0] * w3.shape[1]
                      + w4.shape[0] * out_pad)
    bytes_accessed = int(sum(a.size * jnp.dtype(a.dtype).itemsize for a in operands)
                         + Bp * out_pad * 4)
    cost = pl.CostEstimate(flops=int(flops),
                           transcendentals=int(Bp * out_pad),
                           bytes_accessed=bytes_accessed)

    y = pl.pallas_call(
        mlp_kernel,
        out_shape=jax.ShapeDtypeStruct((Bp, out_pad), jnp.float32),
        grid=grid,
        in_specs=in_specs,
        out_specs=out_spec,
        compiler_params=pltpu.CompilerParams(
            dimension_semantics=("parallel",),   # batch steps are independent (v7x: 2 TCs)
            vmem_limit_bytes=32 * 1024 * 1024,   # explicit budget; safe on v5e/v6e/v7x
        ),
        cost_estimate=cost,
    )(*operands)

    return y[:B, :out_size]


def mlp_reference(x, params, compute_dtype=jnp.float32):
    """Pure-JAX reference mirroring the kernel's cast pattern."""
    w1, b1, w2, b2, w3, b3, w4, b4 = params
    h = x.astype(compute_dtype)
    for w, b, act in ((w1, b1, True), (w2, b2, True), (w3, b3, True), (w4, b4, False)):
        h = jnp.dot(h, w.astype(compute_dtype),
                    preferred_element_type=jnp.float32) + b
        if act:
            h = jnp.maximum(h, 0.0).astype(compute_dtype)
    return jax.nn.sigmoid(h)


def init_params(key, input_size, hidden_size, output_size):
    h4 = hidden_size // 4
    dims = [(input_size, hidden_size),
            (hidden_size, hidden_size),
            (hidden_size, h4),
            (h4, output_size)]
    params = []
    for fan_in, fan_out in dims:
        kw, kb, key = jax.random.split(key, 3)
        bound = 1.0 / jnp.sqrt(fan_in)  # PyTorch nn.Linear default init range
        w = jax.random.uniform(kw, (fan_in, fan_out), jnp.float32, -bound, bound)
        b = jax.random.uniform(kb, (1, fan_out), jnp.float32, -bound, bound)
        params += [w, b]
    return tuple(params)


if __name__ == "__main__":
    batch = 8
    input_size = 16
    hidden_size = 32
    output_size = 4

    key = jax.random.PRNGKey(0)
    kx, kp = jax.random.split(key)
    x = jax.random.normal(kx, (batch, input_size), jnp.float32)
    params = init_params(kp, input_size, hidden_size, output_size)

    fwd = jax.jit(functools.partial(mlp_forward, batch_tile=128,
                                    compute_dtype=jnp.bfloat16))
    y = fwd(x, params)
    jax.block_until_ready(y)
    assert y.shape == (batch, output_size)

    # Tight check against a reference using the same bf16-input / f32-accum recipe.
    y_ref_bf16 = mlp_reference(x, params, compute_dtype=jnp.bfloat16)
    assert jnp.allclose(y, y_ref_bf16, atol=1e-3, rtol=1e-3), "mismatch vs bf16 reference"

    # Looser check against the full-f32 reference (bf16 MXU inputs lose a few bits).
    y_ref_f32 = mlp_reference(x, params, compute_dtype=jnp.float32)
    assert jnp.allclose(y, y_ref_f32, atol=3e-2, rtol=3e-2), "mismatch vs f32 reference"

    print("KERNEL_OK")
</pallas_src>

<mosaic_0001>
module attributes {stable_mosaic.version = 11 : i64} {
  func.func @mlp_kernel(%arg0: i32, %arg1: memref<8x16xbf16, #tpu.memory_space<vmem>>, %arg2: memref<16x32xbf16, #tpu.memory_space<vmem>>, %arg3: memref<1x32xf32, #tpu.memory_space<vmem>>, %arg4: memref<32x32xbf16, #tpu.memory_space<vmem>>, %arg5: memref<1x32xf32, #tpu.memory_space<vmem>>, %arg6: memref<32x8xbf16, #tpu.memory_space<vmem>>, %arg7: memref<1x8xf32, #tpu.memory_space<vmem>>, %arg8: memref<8x128xbf16, #tpu.memory_space<vmem>>, %arg9: memref<1x128xf32, #tpu.memory_space<vmem>>, %arg10: memref<8x128xf32, #tpu.memory_space<vmem>>) attributes {dimension_semantics = [#tpu.dimension_semantics<parallel>], iteration_bounds = array<i64: 1>, scalar_prefetch = 0 : i64, scratch_operands = 0 : i64, tpu.core_type = #tpu.core_type<tc>, window_params = [{transform_indices = @transform_0, window_bounds = array<i64: 8, 16>}, {pipeline_mode = #tpu.pipeline_mode<synchronous>, transform_indices = @transform_1, window_bounds = array<i64: 16, 32>}, {pipeline_mode = #tpu.pipeline_mode<synchronous>, transform_indices = @transform_2, window_bounds = array<i64: 1, 32>}, {pipeline_mode = #tpu.pipeline_mode<synchronous>, transform_indices = @transform_3, window_bounds = array<i64: 32, 32>}, {pipeline_mode = #tpu.pipeline_mode<synchronous>, transform_indices = @transform_4, window_bounds = array<i64: 1, 32>}, {pipeline_mode = #tpu.pipeline_mode<synchronous>, transform_indices = @transform_5, window_bounds = array<i64: 32, 8>}, {pipeline_mode = #tpu.pipeline_mode<synchronous>, transform_indices = @transform_6, window_bounds = array<i64: 1, 8>}, {pipeline_mode = #tpu.pipeline_mode<synchronous>, transform_indices = @transform_7, window_bounds = array<i64: 8, 128>}, {pipeline_mode = #tpu.pipeline_mode<synchronous>, transform_indices = @transform_8, window_bounds = array<i64: 1, 128>}, {transform_indices = @transform_9, window_bounds = array<i64: 8, 128>}]} {
    %c0 = arith.constant 0 : index
    %c0_0 = arith.constant 0 : index
    %0 = vector.load %arg1[%c0, %c0_0] : memref<8x16xbf16, #tpu.memory_space<vmem>>, vector<8x16xbf16>
    %c0_1 = arith.constant 0 : index
    %c0_2 = arith.constant 0 : index
    %1 = vector.load %arg2[%c0_1, %c0_2] : memref<16x32xbf16, #tpu.memory_space<vmem>>, vector<16x32xbf16>
    %cst = arith.constant dense<0.000000e+00> : vector<8x32xf32>
    %2 = tpu.matmul %0, %1, %cst {dimension_numbers = #tpu.dot_dimension_numbers<[1], [0], [0], [1], [0, 0, 1, 1], [], []>} : vector<8x16xbf16>, vector<16x32xbf16>, vector<8x32xf32> -> vector<8x32xf32>
    %c0_3 = arith.constant 0 : index
    %c0_4 = arith.constant 0 : index
    %3 = vector.load %arg3[%c0_3, %c0_4] : memref<1x32xf32, #tpu.memory_space<vmem>>, vector<1x32xf32>
    %4 = vector.broadcast %3 : vector<1x32xf32> to vector<8x32xf32>
    %5 = arith.addf %2, %4 : vector<8x32xf32>
    %cst_5 = arith.constant 0.000000e+00 : f32
    %6 = vector.broadcast %cst_5 : f32 to vector<8x32xf32>
    %7 = arith.maximumf %5, %6 : vector<8x32xf32>
    %8 = arith.truncf %7 : vector<8x32xf32> to vector<8x32xbf16>
    %c0_6 = arith.constant 0 : index
    %c0_7 = arith.constant 0 : index
    %9 = vector.load %arg4[%c0_6, %c0_7] : memref<32x32xbf16, #tpu.memory_space<vmem>>, vector<32x32xbf16>
    %cst_8 = arith.constant dense<0.000000e+00> : vector<8x32xf32>
    %10 = tpu.matmul %8, %9, %cst_8 {dimension_numbers = #tpu.dot_dimension_numbers<[1], [0], [0], [1], [0, 0, 1, 1], [], []>} : vector<8x32xbf16>, vector<32x32xbf16>, vector<8x32xf32> -> vector<8x32xf32>
    %c0_9 = arith.constant 0 : index
    %c0_10 = arith.constant 0 : index
    %11 = vector.load %arg5[%c0_9, %c0_10] : memref<1x32xf32, #tpu.memory_space<vmem>>, vector<1x32xf32>
    %12 = vector.broadcast %11 : vector<1x32xf32> to vector<8x32xf32>
    %13 = arith.addf %10, %12 : vector<8x32xf32>
    %cst_11 = arith.constant 0.000000e+00 : f32
    %14 = vector.broadcast %cst_11 : f32 to vector<8x32xf32>
    %15 = arith.maximumf %13, %14 : vector<8x32xf32>
    %16 = arith.truncf %15 : vector<8x32xf32> to vector<8x32xbf16>
    %c0_12 = arith.constant 0 : index
    %c0_13 = arith.constant 0 : index
    %17 = vector.load %arg6[%c0_12, %c0_13] : memref<32x8xbf16, #tpu.memory_space<vmem>>, vector<32x8xbf16>
    %cst_14 = arith.constant dense<0.000000e+00> : vector<8x8xf32>
    %18 = tpu.matmul %16, %17, %cst_14 {dimension_numbers = #tpu.dot_dimension_numbers<[1], [0], [0], [1], [0, 0, 1, 1], [], []>} : vector<8x32xbf16>, vector<32x8xbf16>, vector<8x8xf32> -> vector<8x8xf32>
    %c0_15 = arith.constant 0 : index
    %c0_16 = arith.constant 0 : index
    %19 = vector.load %arg7[%c0_15, %c0_16] : memref<1x8xf32, #tpu.memory_space<vmem>>, vector<1x8xf32>
    %20 = vector.broadcast %19 : vector<1x8xf32> to vector<8x8xf32>
    %21 = arith.addf %18, %20 : vector<8x8xf32>
    %cst_17 = arith.constant 0.000000e+00 : f32
    %22 = vector.broadcast %cst_17 : f32 to vector<8x8xf32>
    %23 = arith.maximumf %21, %22 : vector<8x8xf32>
    %24 = arith.truncf %23 : vector<8x8xf32> to vector<8x8xbf16>
    %c0_18 = arith.constant 0 : index
    %c0_19 = arith.constant 0 : index
    %25 = vector.load %arg8[%c0_18, %c0_19] : memref<8x128xbf16, #tpu.memory_space<vmem>>, vector<8x128xbf16>
    %cst_20 = arith.constant dense<0.000000e+00> : vector<8x128xf32>
    %26 = tpu.matmul %24, %25, %cst_20 {dimension_numbers = #tpu.dot_dimension_numbers<[1], [0], [0], [1], [0, 0, 1, 1], [], []>} : vector<8x8xbf16>, vector<8x128xbf16>, vector<8x128xf32> -> vector<8x128xf32>
    %c0_21 = arith.constant 0 : index
    %c0_22 = arith.constant 0 : index
    %27 = vector.load %arg9[%c0_21, %c0_22] : memref<1x128xf32, #tpu.memory_space<vmem>>, vector<1x128xf32>
    %28 = vector.broadcast %27 : vector<1x128xf32> to vector<8x128xf32>
    %29 = arith.addf %26, %28 : vector<8x128xf32>
    %30 = arith.negf %29 : vector<8x128xf32>
    %31 = math.exp %30 : vector<8x128xf32>
    %cst_23 = arith.constant 1.000000e+00 : f32
    %32 = vector.broadcast %cst_23 : f32 to vector<8x128xf32>
    %33 = arith.addf %32, %31 : vector<8x128xf32>
    %34 = arith.divf %32, %33 : vector<8x128xf32>
    %c0_24 = arith.constant 0 : index
    %c0_25 = arith.constant 0 : index
    %35 = vector.load %arg10[%c0_24, %c0_25] : memref<8x128xf32, #tpu.memory_space<vmem>>, vector<8x128xf32>
    tpu.vector_store %arg10[%c0_24, %c0_25], %34 {strides = array<i32>} : memref<8x128xf32, #tpu.memory_space<vmem>>, vector<8x128xf32>,
    return
  }
  func.func @transform_0(%arg0: i32) -> (i32, i32) {
    %c0_i32 = arith.constant 0 : i32
    %c0_i32_0 = arith.constant 0 : i32
    return %arg0, %c0_i32 : i32, i32
  }
  func.func @transform_1(%arg0: i32) -> (i32, i32) {
    %c0_i32 = arith.constant 0 : i32
    %c0_i32_0 = arith.constant 0 : i32
    %c0_i32_1 = arith.constant 0 : i32
    return %c0_i32, %c0_i32_0 : i32, i32
  }
  func.func @transform_2(%arg0: i32) -> (i32, i32) {
    %c0_i32 = arith.constant 0 : i32
    %c0_i32_0 = arith.constant 0 : i32
    %c0_i32_1 = arith.constant 0 : i32
    return %c0_i32, %c0_i32_0 : i32, i32
  }
  func.func @transform_3(%arg0: i32) -> (i32, i32) {
    %c0_i32 = arith.constant 0 : i32
    %c0_i32_0 = arith.constant 0 : i32
    %c0_i32_1 = arith.constant 0 : i32
    return %c0_i32, %c0_i32_0 : i32, i32
  }
  func.func @transform_4(%arg0: i32) -> (i32, i32) {
    %c0_i32 = arith.constant 0 : i32
    %c0_i32_0 = arith.constant 0 : i32
    %c0_i32_1 = arith.constant 0 : i32
    return %c0_i32, %c0_i32_0 : i32, i32
  }
  func.func @transform_5(%arg0: i32) -> (i32, i32) {
    %c0_i32 = arith.constant 0 : i32
    %c0_i32_0 = arith.constant 0 : i32
    %c0_i32_1 = arith.constant 0 : i32
    return %c0_i32, %c0_i32_0 : i32, i32
  }
  func.func @transform_6(%arg0: i32) -> (i32, i32) {
    %c0_i32 = arith.constant 0 : i32
    %c0_i32_0 = arith.constant 0 : i32
    %c0_i32_1 = arith.constant 0 : i32
    return %c0_i32, %c0_i32_0 : i32, i32
  }
  func.func @transform_7(%arg0: i32) -> (i32, i32) {
    %c0_i32 = arith.constant 0 : i32
    %c0_i32_0 = arith.constant 0 : i32
    %c0_i32_1 = arith.constant 0 : i32
    return %c0_i32, %c0_i32_0 : i32, i32
  }
  func.func @transform_8(%arg0: i32) -> (i32, i32) {
    %c0_i32 = arith.constant 0 : i32
    %c0_i32_0 = arith.constant 0 : i32
    %c0_i32_1 = arith.constant 0 : i32
    return %c0_i32, %c0_i32_0 : i32, i32
  }
  func.func @transform_9(%arg0: i32) -> (i32, i32) {
    %c0_i32 = arith.constant 0 : i32
    %c0_i32_0 = arith.constant 0 : i32
    return %arg0, %c0_i32 : i32, i32
  }
}

</mosaic_0001>

<llo_original>
// kernel: mlp_forward.1
$region0: #{mlp_forward.1}
  #allocation0 [shape = 'u32[]', space=smem, size = 0x4, offset = 0x4, fixed_abs, tag = 'smem constant byte address 0x4 - core index']
  #allocation1 [shape = 'u32[144,128]{1,0:T(1,128)}', space=vmem, size = 0x12000, scoped, tag = 'internal scratch']
  %s0 = inlined_call_operand.vmem [shape: bf16[8,16], index: 0, kind: input, shape index: {}]
  %s1 = inlined_call_operand.vmem [shape: bf16[16,32], index: 1, kind: input, shape index: {}]
  %s2 = inlined_call_operand.vmem [shape: f32[1,32], index: 2, kind: input, shape index: {}]
  %s3 = inlined_call_operand.vmem [shape: bf16[32,32], index: 3, kind: input, shape index: {}]
  %s4 = inlined_call_operand.vmem [shape: f32[1,32], index: 4, kind: input, shape index: {}]
  %s5 = inlined_call_operand.vmem [shape: bf16[32,8], index: 5, kind: input, shape index: {}]
  %s6 = inlined_call_operand.vmem [shape: f32[1,8], index: 6, kind: input, shape index: {}]
  %s7 = inlined_call_operand.vmem [shape: bf16[8,128], index: 7, kind: input, shape index: {}]
  %s8 = inlined_call_operand.vmem [shape: f32[1,128], index: 8, kind: input, shape index: {}]
  %s9 = inlined_call_operand.vmem [shape: f32[8,128], index: 9, kind: output, shape index: {}]
  %s10 = sld [smem:[#allocation0]]
  $region46: #{mlp_forward.1} parent=0
    _
  %s12 = ssub.s32 1, %s10
  %s13 = scalar_select 0, %s12, %s10
  // Predicated region
  $region2: #{mlp_forward.1} parent=0 // pred_check
    _
  $region3: #{mlp_forward.1} parent=0 // pred_check_branch
    %15 = sbr.rel (0) target = $region5
  $region4: #{mlp_forward.1} parent=0 // pred_region
    _
  $region5: #{mlp_forward.1} parent=0 // pred_fallthru
    _
  // Predicated region
  $region6: #{mlp_forward.1} parent=0 // pred_check
    _
  $region7: #{mlp_forward.1} parent=0 // pred_check_branch
    %17 = sbr.rel (0) target = $region9
  $region8: #{mlp_forward.1} parent=0 // pred_region
    _
  $region9: #{mlp_forward.1} parent=0 // pred_fallthru
    _
  // Predicated region
  $region10: #{mlp_forward.1} parent=0 // pred_check
    _
  $region11: #{mlp_forward.1} parent=0 // pred_check_branch
    %19 = sbr.rel (0) target = $region13
  $region12: #{mlp_forward.1} parent=0 // pred_region
    _
  $region13: #{mlp_forward.1} parent=0 // pred_fallthru
    _
  // Predicated region
  $region14: #{mlp_forward.1} parent=0 // pred_check
    _
  $region15: #{mlp_forward.1} parent=0 // pred_check_branch
    %21 = sbr.rel (0) target = $region17
  $region16: #{mlp_forward.1} parent=0 // pred_region
    _
  $region17: #{mlp_forward.1} parent=0 // pred_fallthru
    _
  // Predicated region
  $region18: #{mlp_forward.1} parent=0 // pred_check
    _
  $region19: #{mlp_forward.1} parent=0 // pred_check_branch
    %23 = sbr.rel (0) target = $region21
  $region20: #{mlp_forward.1} parent=0 // pred_region
    _
  $region21: #{mlp_forward.1} parent=0 // pred_fallthru
    _
  // Predicated region
  $region22: #{mlp_forward.1} parent=0 // pred_check
    _
  $region23: #{mlp_forward.1} parent=0 // pred_check_branch
    %25 = sbr.rel (0) target = $region25
  $region24: #{mlp_forward.1} parent=0 // pred_region
    _
  $region25: #{mlp_forward.1} parent=0 // pred_fallthru
    _
  // Predicated region
  $region26: #{mlp_forward.1} parent=0 // pred_check
    _
  $region27: #{mlp_forward.1} parent=0 // pred_check_branch
    %27 = sbr.rel (0) target = $region29
  $region28: #{mlp_forward.1} parent=0 // pred_region
    _
  $region29: #{mlp_forward.1} parent=0 // pred_fallthru
    _
  // Predicated region
  $region30: #{mlp_forward.1} parent=0 // pred_check
    _
  $region31: #{mlp_forward.1} parent=0 // pred_check_branch
    %29 = sbr.rel (0) target = $region33
  $region32: #{mlp_forward.1} parent=0 // pred_region
    _
  $region33: #{mlp_forward.1} parent=0 // pred_fallthru
    _
  // Predicated region
  $region34: #{mlp_forward.1} parent=0 // pred_check
    _
  $region35: #{mlp_forward.1} parent=0 // pred_check_branch
    %31 = sbr.rel (0) target = $region37
  $region36: #{mlp_forward.1} parent=0 // pred_region
    _
  $region37: #{mlp_forward.1} parent=0 // pred_fallthru
    _
  %v33 = vld [vmem:[%s0] sm:$0xf]
  %v34 = vld [vmem:[%s1] sm:$0xf]
  %v35 = vld [vmem:[%s1 + $0x4] sm:$0xf]
  %v36 = vld [vmem:[%s2] sm:$0x1]
  %v38 = vlaneseq
  %v39 = vshrl.u32 %v38, 7
  %v40 = vsub.s32 0, %v39
  %v41 = vrot.slane %v36, %v40
  %v45 = vunpack.c.l.b16 %v34
  %v46 = vunpack.c.l.b16 %v35
  %v47 = vpack.c.b16 %v46, %v45
  %vm49 = vcmask 130048
  %v51 = vsel %vm49, %v33, 0
  %53 = vmatprep.subr.bf16.mxu0 0
  %54 = vmatpush1.bf16.msra.mxu0 0
  %55 = vmatprep.subr.bf16.mxu0 0
  %56 = vmatpush1.bf16.msra.mxu0 0
  %57 = vmatprep.subr.bf16.mxu0 0
  %58 = vmatpush1.bf16.msra.mxu0 0
  %59 = vmatprep.subr.bf16.mxu0 0
  %60 = vmatpush1.bf16.msra.mxu0 0
  %61 = vmatprep.subr.bf16.mxu0 0
  %62 = vmatpush1.bf16.msra.mxu0 0
  %63 = vmatprep.subr.bf16.mxu0 0
  %64 = vmatpush1.bf16.msra.mxu0 0
  %65 = vmatprep.subr.bf16.mxu0 0
  %66 = vmatpush1.bf16.msra.mxu0 0
  %67 = vmatprep.subr.bf16.mxu0 0
  %68 = vmatpush1.bf16.msra.mxu0 %v47
  %69 = vmatprep.subr.bf16.mxu0 0
  %70 = vmatpush2.bf16.msra.mxu0 0
  %71 = vmatprep.subr.bf16.mxu0 0
  %72 = vmatpush2.bf16.msra.mxu0 0
  %73 = vmatprep.subr.bf16.mxu0 0
  %74 = vmatpush2.bf16.msra.mxu0 0
  %75 = vmatprep.subr.bf16.mxu0 0
  %76 = vmatpush2.bf16.msra.mxu0 0
  %77 = vmatprep.subr.bf16.mxu0 0
  %78 = vmatpush2.bf16.msra.mxu0 0
  %79 = vmatprep.subr.bf16.mxu0 0
  %80 = vmatpush2.bf16.msra.mxu0 0
  %81 = vmatprep.subr.bf16.mxu0 0
  %82 = vmatpush2.bf16.msra.mxu0 0
  %83 = vmatprep.subr.bf16.mxu0 0
  %84 = vmatpush2.bf16.msra.mxu0 0
  %85 = vmatprep.mubr.bf16.mxu0 0
  %86 = vmatmul.mubr.bf16.gmra.mxu0 %v51
  %v87 = vpop.f32.mrf.mxu0
  %v88 = vadd.f32 %v41, %v87
  %v89 = vpop.f32.mrf.mxu0
  %v90 = vpop.f32.mrf.mxu0
  %v91 = vpop.f32.mrf.mxu0
  %92 = vdwg.mxu0
  %v93 = vmax.f32 %v88, 0.0
  %v94 = vpack.c.bf16 %v93, %v93
  %v95 = vld [vmem:[%s3] sm:$0xf]
  %v96 = vld [vmem:[%s3 + $0x4] sm:$0xf]
  %v97 = vld [vmem:[%s3 + $0x8] sm:$0xf]
  %v98 = vld [vmem:[%s3 + $0xc] sm:$0xf]
  %v99 = vld [vmem:[%s4] sm:$0x1]
  %v101 = vlaneseq
  %v102 = vshrl.u32 %v101, 7
  %v103 = vsub.s32 0, %v102
  %v104 = vrot.slane %v99, %v103
  %v110 = vunpack.c.l.b16 %v95
  %v111 = vunpack.c.l.b16 %v96
  %v112 = vunpack.c.l.b16 %v97
  %v113 = vunpack.c.l.b16 %v98
  %v114 = vpack.c.b16 %v111, %v110
  %v115 = vpack.c.b16 %v113, %v112
  %vm118 = vcmask 261120
  %v120 = vsel %vm118, %v94, 0
  %122 = vmatprep.subr.bf16.mxu0 0
  %123 = vmatpush1.bf16.msra.mxu0 0
  %124 = vmatprep.subr.bf16.mxu0 0
  %125 = vmatpush1.bf16.msra.mxu0 0
  %126 = vmatprep.subr.bf16.mxu0 0
  %127 = vmatpush1.bf16.msra.mxu0 0
  %128 = vmatprep.subr.bf16.mxu0 0
  %129 = vmatpush1.bf16.msra.mxu0 0
  %130 = vmatprep.subr.bf16.mxu0 0
  %131 = vmatpush1.bf16.msra.mxu0 0
  %132 = vmatprep.subr.bf16.mxu0 0
  %133 = vmatpush1.bf16.msra.mxu0 0
  %134 = vmatprep.subr.bf16.mxu0 0
  %135 = vmatpush1.bf16.msra.mxu0 %v115
  %136 = vmatprep.subr.bf16.mxu0 0
  %137 = vmatpush1.bf16.msra.mxu0 %v114
  %138 = vmatprep.subr.bf16.mxu0 0
  %139 = vmatpush2.bf16.msra.mxu0 0
  %140 = vmatprep.subr.bf16.mxu0 0
  %141 = vmatpush2.bf16.msra.mxu0 0
  %142 = vmatprep.subr.bf16.mxu0 0
  %143 = vmatpush2.bf16.msra.mxu0 0
  %144 = vmatprep.subr.bf16.mxu0 0
  %145 = vmatpush2.bf16.msra.mxu0 0
  %146 = vmatprep.subr.bf16.mxu0 0
  %147 = vmatpush2.bf16.msra.mxu0 0
  %148 = vmatprep.subr.bf16.mxu0 0
  %149 = vmatpush2.bf16.msra.mxu0 0
  %150 = vmatprep.subr.bf16.mxu0 0
  %151 = vmatpush2.bf16.msra.mxu0 0
  %152 = vmatprep.subr.bf16.mxu0 0
  %153 = vmatpush2.bf16.msra.mxu0 0
  %154 = vmatprep.mubr.bf16.mxu0 0
  %155 = vmatmul.mubr.bf16.gmra.mxu0 %v120
  %v156 = vpop.f32.mrf.mxu0
  %v157 = vadd.f32 %v104, %v156
  %v158 = vpop.f32.mrf.mxu0
  %v159 = vpop.f32.mrf.mxu0
  %v160 = vpop.f32.mrf.mxu0
  %161 = vdwg.mxu0
  %v162 = vmax.f32 %v157, 0.0
  %v163 = vpack.c.bf16 %v162, %v162
  %v164 = vld [vmem:[%s5] sm:$0xf]
  %v165 = vld [vmem:[%s5 + $0x4] sm:$0xf]
  %v166 = vld [vmem:[%s5 + $0x8] sm:$0xf]
  %v167 = vld [vmem:[%s5 + $0xc] sm:$0xf]
  %v168 = vld [vmem:[%s6] sm:$0x1]
  %v170 = vlaneseq
  %v171 = vshrl.u32 %v170, 7
  %v172 = vsub.s32 0, %v171
  %v173 = vrot.slane %v168, %v172
  %v179 = vunpack.c.l.b16 %v164
  %v180 = vunpack.c.l.b16 %v165
  %v181 = vunpack.c.l.b16 %v166
  %v182 = vunpack.c.l.b16 %v167
  %v183 = vpack.c.b16 %v180, %v179
  %v184 = vpack.c.b16 %v182, %v181
  %v188 = vsel %vm118, %v163, 0
  %190 = vmatprep.subr.bf16.mxu0 0
  %191 = vmatpush1.bf16.msra.mxu0 0
  %192 = vmatprep.subr.bf16.mxu0 0
  %193 = vmatpush1.bf16.msra.mxu0 0
  %194 = vmatprep.subr.bf16.mxu0 0
  %195 = vmatpush1.bf16.msra.mxu0 0
  %196 = vmatprep.subr.bf16.mxu0 0
  %197 = vmatpush1.bf16.msra.mxu0 0
  %198 = vmatprep.subr.bf16.mxu0 0
  %199 = vmatpush1.bf16.msra.mxu0 0
  %200 = vmatprep.subr.bf16.mxu0 0
  %201 = vmatpush1.bf16.msra.mxu0 0
  %202 = vmatprep.subr.bf16.mxu0 0
  %203 = vmatpush1.bf16.msra.mxu0 %v184
  %204 = vmatprep.subr.bf16.mxu0 0
  %205 = vmatpush1.bf16.msra.mxu0 %v183
  %206 = vmatprep.subr.bf16.mxu0 0
  %207 = vmatpush2.bf16.msra.mxu0 0
  %208 = vmatprep.subr.bf16.mxu0 0
  %209 = vmatpush2.bf16.msra.mxu0 0
  %210 = vmatprep.subr.bf16.mxu0 0
  %211 = vmatpush2.bf16.msra.mxu0 0
  %212 = vmatprep.subr.bf16.mxu0 0
  %213 = vmatpush2.bf16.msra.mxu0 0
  %214 = vmatprep.subr.bf16.mxu0 0
  %215 = vmatpush2.bf16.msra.mxu0 0
  %216 = vmatprep.subr.bf16.mxu0 0
  %217 = vmatpush2.bf16.msra.mxu0 0
  %218 = vmatprep.subr.bf16.mxu0 0
  %219 = vmatpush2.bf16.msra.mxu0 0
  %220 = vmatprep.subr.bf16.mxu0 0
  %221 = vmatpush2.bf16.msra.mxu0 0
  %222 = vmatprep.mubr.bf16.mxu0 0
  %223 = vmatmul.mubr.bf16.gmra.mxu0 %v188
  %v224 = vpop.f32.mrf.mxu0
  %v225 = vadd.f32 %v173, %v224
  %v226 = vpop.f32.mrf.mxu0
  %v227 = vpop.f32.mrf.mxu0
  %v228 = vpop.f32.mrf.mxu0
  %229 = vdwg.mxu0
  %v230 = vmax.f32 %v225, 0.0
  %v231 = vpack.c.bf16 %v230, %v230
  %v232 = vld [vmem:[%s7] sm:$0xf]
  %v233 = vld [vmem:[%s8] sm:$0x1]
  %v235 = vlaneseq
  %v236 = vshrl.u32 %v235, 7
  %v237 = vsub.s32 0, %v236
  %v238 = vrot.slane %v233, %v237
  %vm240 = vcmask 64512
  %v242 = vsel %vm240, %v231, 0
  %vm244 = vcmask 1043456
  %v246 = vsel %vm244, %v232, 0
  %248 = vmatprep.subr.bf16.mxu0 0
  %249 = vmatpush1.bf16.msra.mxu0 0
  %250 = vmatprep.subr.bf16.mxu0 0
  %251 = vmatpush1.bf16.msra.mxu0 0
  %252 = vmatprep.subr.bf16.mxu0 0
  %253 = vmatpush1.bf16.msra.mxu0 0
  %254 = vmatprep.subr.bf16.mxu0 0
  %255 = vmatpush1.bf16.msra.mxu0 0
  %256 = vmatprep.subr.bf16.mxu0 0
  %257 = vmatpush1.bf16.msra.mxu0 0
  %258 = vmatprep.subr.bf16.mxu0 0
  %259 = vmatpush1.bf16.msra.mxu0 0
  %260 = vmatprep.subr.bf16.mxu0 0
  %261 = vmatpush1.bf16.msra.mxu0 0
  %262 = vmatprep.subr.bf16.mxu0 0
  %263 = vmatpush1.bf16.msra.mxu0 %v246
  %264 = vmatprep.subr.bf16.mxu0 0
  %265 = vmatpush2.bf16.msra.mxu0 0
  %266 = vmatprep.subr.bf16.mxu0 0
  %267 = vmatpush2.bf16.msra.mxu0 0
  %268 = vmatprep.subr.bf16.mxu0 0
  %269 = vmatpush2.bf16.msra.mxu0 0
  %270 = vmatprep.subr.bf16.mxu0 0
  %271 = vmatpush2.bf16.msra.mxu0 0
  %272 = vmatprep.subr.bf16.mxu0 0
  %273 = vmatpush2.bf16.msra.mxu0 0
  %274 = vmatprep.subr.bf16.mxu0 0
  %275 = vmatpush2.bf16.msra.mxu0 0
  %276 = vmatprep.subr.bf16.mxu0 0
  %277 = vmatpush2.bf16.msra.mxu0 0
  %278 = vmatprep.subr.bf16.mxu0 0
  %279 = vmatpush2.bf16.msra.mxu0 0
  %280 = vmatprep.mubr.bf16.mxu0 0
  %281 = vmatmul.mubr.bf16.gmra.mxu0 %v242
  %v282 = vpop.f32.mrf.mxu0
  %v283 = vadd.f32 %v238, %v282
  %v284 = vpop.f32.mrf.mxu0
  %v285 = vpop.f32.mrf.mxu0
  %v286 = vpop.f32.mrf.mxu0
  %287 = vdwg.mxu0
  %v288 = vxor.u32 %v283, 2147483648
  %v289 = vmul.f32 %v288, 1.442695
  %v290 = vpow.pop %v289
  %v291 = vadd.f32 %v290, 1.0
  %v292 = vrcp.pop %v291
  %v293 = vmul.f32 1.0, %v292
  %294 = vst [vmem:[%s9] sm:$0xff] %v293
  // Predicated region
  $region38: #{mlp_forward.1} parent=0 // pred_check
    _
  $region39: #{mlp_forward.1} parent=0 // pred_check_branch
    %296 = sbr.rel (0) target = $region41
  $region40: #{mlp_forward.1} parent=0 // pred_region
    _
  $region41: #{mlp_forward.1} parent=0 // pred_fallthru
    _
  // Predicated region
  $region42: #{mlp_forward.1} parent=0 // pred_check
    _
  $region43: #{mlp_forward.1} parent=0 // pred_check_branch
    %298 = sbr.rel (0) target = $region45
  $region44: #{mlp_forward.1} parent=0 // pred_region
    _
  $region45: #{mlp_forward.1} parent=0 // pred_fallthru
    _

</llo_original>
